<compile_context>
chip_gen: v7x
topology: tpu7x:2x2x1
jax: 0.10.0
libtpu: 0.0.40
codegen_flags: <defaults>
</compile_context>

<pallas_src>
import functools

import jax
import jax.numpy as jnp
from jax.experimental import pallas as pl
from jax.experimental.pallas import tpu as pltpu


def make_divisible(v, divisor=8, min_value=None, round_limit=0.9):
    min_value = min_value or divisor
    new_v = max(min_value, int(v + divisor / 2) // divisor * divisor)
    if new_v < round_limit * v:
        new_v += divisor
    return new_v


# --------------------------------------------------------------------------
# Kernels
# --------------------------------------------------------------------------

def _se_fused_kernel(x_ref, w1t_ref, b1_ref, w2t_ref, b2_ref, o_ref, *, inv_hw):
    """One-pass SE on a (B_blk, C, HW) slab.

    Safe with a ragged final batch block under the cdiv grid: every output
    row depends only on its own input row (no cross-batch reduction), and
    Pallas masks out-of-range rows on writeback.
    """
    x = x_ref[...]                                            # (B, C, HW), io dtype

    # Squeeze: per-sample channel means, f32 accumulation.
    s = jnp.sum(x.astype(jnp.float32), axis=-1) * inv_hw      # (B, C) lane-dense

    # fc1 (1x1 conv C -> rd) + ReLU : lane-dense row matmul.
    h = jnp.dot(s, w1t_ref[...], preferred_element_type=jnp.float32,
                precision=jax.lax.Precision.HIGHEST) + b1_ref[...]   # (B, rd)
    h = jnp.maximum(h, 0.0)

    # fc2 (1x1 conv rd -> C) + sigmoid gate.
    g = jnp.dot(h, w2t_ref[...], preferred_element_type=jnp.float32,
                precision=jax.lax.Precision.HIGHEST) + b2_ref[...]   # (B, C)
    g = jax.nn.sigmoid(g)

    # Excite: broadcast-multiply in the I/O dtype.
    # NOTE: for bf16 I/O the gate is rounded to bf16 before the multiply
    # (one extra rounding vs the PyTorch fp32 gate); covered by tolerance.
    o_ref[...] = (x * g.astype(x.dtype)[:, :, None]).astype(o_ref.dtype)


def _se_sum_kernel(x_ref, s_ref, *, hw, hw_blk, ragged):
    """Two-phase fallback, pass 1: per-sample channel sums into a (C, 1) acc."""
    @pl.when(pl.program_id(1) == 0)
    def _init():
        s_ref[...] = jnp.zeros_like(s_ref)

    x = x_ref[...].astype(jnp.float32)                        # (C, hw_blk)
    if ragged:
        # Ragged final HW chunk under the cdiv grid: lanes past the true HW
        # extent hold unspecified data -> mask them out of the sum.
        lane = jax.lax.broadcasted_iota(jnp.int32, x.shape, 1)
        x = jnp.where(pl.program_id(1) * hw_blk + lane < hw, x, 0.0)

    # Keep the reduction result in its natural sublane-major (C, 1) layout:
    # no cross-lane relayout per chunk (unlike storing into a (1, C) row).
    s_ref[...] += jnp.sum(x, axis=-1, keepdims=True)


def _se_apply_kernel(g_ref, x_ref, o_ref):
    """Two-phase fallback, pass 2: re-stream x and apply the gate."""
    # g_ref: (C, 1) gate (I/O dtype), x_ref: (C, hw_blk).  Ragged tail of the
    # output chunk is masked by Pallas on writeback.
    o_ref[...] = (x_ref[...] * g_ref[...]).astype(o_ref.dtype)


# --------------------------------------------------------------------------
# Tiling helpers
# --------------------------------------------------------------------------

def _default_vmem_limit():
    cap = None
    try:
        info = pltpu.get_tpu_info()
        cap = getattr(info, "vmem_capacity_bytes", None)
    except Exception:
        cap = None
    if not cap:
        cap = 64 * 1024 * 1024          # conservative default: v7x per-TC VMEM
    # Leave headroom below physical VMEM; cap the scoped request.
    return int(min(cap * 3 // 4, 96 * 1024 * 1024))


def _choose_batch_block(n, per_sample_io, per_sample_fp, budget,
                        target_fp=32 << 20, pref_steps=8, min_slab=1 << 20):
    """Samples per grid step, sized for pipelining rather than max occupancy.

    * per-step footprint (incl. in-kernel f32 temporaries) capped at ~32 MiB
      (safe inside v7x's ~48 MiB scoped VMEM) and at the scoped budget,
    * prefer >= pref_steps grid steps (>= 3-4 per TensorCore on v7x megacore)
      so DMA-in / compute / DMA-out actually overlap,
    * but keep each in/out slab above ~1 MiB (per-step overhead ~0.35 us).
    """
    cap = min(target_fp, budget)
    b_fit = max(1, min(n, cap // max(per_sample_fp, 1)))       # VMEM-feasible
    b_steps = max(1, n // pref_steps)                          # >= pref_steps
    b_slab = max(1, -(-min_slab // max(per_sample_io, 1)))     # slab >= ~1 MiB
    return max(1, min(b_fit, max(b_steps, b_slab), n))


# --------------------------------------------------------------------------
# Wrapper
# --------------------------------------------------------------------------

def squeeze_excite(x, w1, b1, w2, b2, *, vmem_limit_bytes=None,
                   force_two_phase=False, force_batch_block=None,
                   force_hw_block=None):
    """x: (N, C, H, W).  w1: (rd, C), b1: (rd,), w2: (C, rd), b2: (C,)."""
    N, C, H, W = x.shape
    rd = w1.shape[0]
    HW = H * W
    itemsize = jnp.dtype(x.dtype).itemsize

    if vmem_limit_bytes is None:
        vmem_limit_bytes = _default_vmem_limit()
    slab_budget = max(int(vmem_limit_bytes) - (4 << 20), 1 << 20)

    # No HBM-side padding: x stays (N, C, HW); BlockSpecs use full-extent HW.
    x_flat = x.reshape(N, C, HW)

    # Pre-transposed weights -> lane-dense row matmuls inside the kernel.
    w1t = jnp.transpose(w1)             # (C, rd)
    w2t = jnp.transpose(w2)             # (rd, C)
    b1r = b1.reshape(1, rd)
    b2r = b2.reshape(1, C)

    per_sample_io = C * HW * itemsize
    # Conservative per-sample VMEM footprint: double-buffered in + out blocks
    # (4 * itemsize) + in-kernel f32 reduce temporary (4 B/elem) + gated
    # product temporary (itemsize).  Bounds the uncounted temporaries that
    # threaten v7x's 64 MiB VMEM without chunking the HW axis in-kernel.
    per_sample_fp = C * HW * (5 * itemsize + 4)
    one_pass_fits = per_sample_fp <= slab_budget

    if one_pass_fits and not force_two_phase:
        # ------------------------- fused one-pass path --------------------
        b_blk = int(force_batch_block) if force_batch_block else \
            _choose_batch_block(N, per_sample_io, per_sample_fp, slab_budget)
        grid = (pl.cdiv(N, b_blk),)
        kernel = functools.partial(_se_fused_kernel, inv_hw=1.0 / float(HW))
        cost = pl.CostEstimate(
            flops=int(2 * N * C * HW + 4 * N * C * rd),
            transcendentals=int(N * C),
            bytes_accessed=int(2 * N * C * HW * itemsize))

        out_flat = pl.pallas_call(
            kernel,
            out_shape=jax.ShapeDtypeStruct((N, C, HW), x.dtype),
            grid_spec=pltpu.PrefetchScalarGridSpec(
                num_scalar_prefetch=0,
                grid=grid,
                in_specs=[
                    pl.BlockSpec((b_blk, C, HW), lambda i: (i, 0, 0)),  # x
                    pl.BlockSpec((C, rd), lambda i: (0, 0)),            # w1^T
                    pl.BlockSpec((1, rd), lambda i: (0, 0)),            # b1
                    pl.BlockSpec((rd, C), lambda i: (0, 0)),            # w2^T
                    pl.BlockSpec((1, C), lambda i: (0, 0)),             # b2
                ],
                out_specs=pl.BlockSpec((b_blk, C, HW), lambda i: (i, 0, 0)),
            ),
            compiler_params=pltpu.CompilerParams(
                dimension_semantics=("parallel",),
                vmem_limit_bytes=int(vmem_limit_bytes)),
            cost_estimate=cost,
        )(x_flat, w1t, b1r, w2t, b2r)
        return out_flat.reshape(N, C, H, W)

    # ------------------- two-phase fallback (huge activations) ------------
    # hw_blk: largest 128-multiple whose per-step footprint (double-buffered
    # in + out chunks + temporaries) fits the budget; cdiv grid over chunks
    # (no divisor-of-HW requirement), ragged tail masked in pass 1.
    if force_hw_block is not None:
        hw_blk = min(int(force_hw_block), HW)
    else:
        fp_per_lane = C * (5 * itemsize + 4)
        max_lanes = max(128, min(slab_budget, 32 << 20) // max(fp_per_lane, 1))
        hw_blk = max(128, (max_lanes // 128) * 128)
        if hw_blk >= HW:
            hw_blk = HW                 # full-extent minor block: always legal
    n_chunks = pl.cdiv(HW, hw_blk)
    ragged = (HW % hw_blk) != 0

    # Pass 1: per-sample channel sums (resident (C,1) f32 accumulator over the
    # chunk axis, which is the innermost "arbitrary" grid axis).
    sums = pl.pallas_call(
        functools.partial(_se_sum_kernel, hw=HW, hw_blk=hw_blk, ragged=ragged),
        out_shape=jax.ShapeDtypeStruct((N, C, 1), jnp.float32),
        grid_spec=pltpu.PrefetchScalarGridSpec(
            num_scalar_prefetch=0,
            grid=(N, n_chunks),
            in_specs=[pl.BlockSpec((None, C, hw_blk), lambda n, h: (n, 0, h))],
            out_specs=pl.BlockSpec((None, C, 1), lambda n, h: (n, 0, 0)),
        ),
        compiler_params=pltpu.CompilerParams(
            dimension_semantics=("parallel", "arbitrary"),
            vmem_limit_bytes=int(vmem_limit_bytes)),
        cost_estimate=pl.CostEstimate(
            flops=int(N * C * HW), transcendentals=0,
            bytes_accessed=int(N * C * HW * itemsize)),
    )(x_flat)

    # Tiny gate MLP on (N, C): negligible vs the two x streams; f32, HIGHEST.
    s = sums.reshape(N, C) * (1.0 / float(HW))
    h = jnp.maximum(
        jnp.dot(s, w1t, precision=jax.lax.Precision.HIGHEST) + b1r, 0.0)
    g = jax.nn.sigmoid(
        jnp.dot(h, w2t, precision=jax.lax.Precision.HIGHEST) + b2r)
    g = g.astype(x.dtype).reshape(N, C, 1)

    # Pass 2: re-stream x in HW chunks and apply the gate.
    out_flat = pl.pallas_call(
        _se_apply_kernel,
        out_shape=jax.ShapeDtypeStruct((N, C, HW), x.dtype),
        grid_spec=pltpu.PrefetchScalarGridSpec(
            num_scalar_prefetch=0,
            grid=(N, n_chunks),
            in_specs=[
                pl.BlockSpec((None, C, 1), lambda n, h: (n, 0, 0)),       # gate
                pl.BlockSpec((None, C, hw_blk), lambda n, h: (n, 0, h)),  # x
            ],
            out_specs=pl.BlockSpec((None, C, hw_blk), lambda n, h: (n, 0, h)),
        ),
        compiler_params=pltpu.CompilerParams(
            dimension_semantics=("parallel", "parallel"),
            vmem_limit_bytes=int(vmem_limit_bytes)),
        cost_estimate=pl.CostEstimate(
            flops=int(N * C * HW), transcendentals=0,
            bytes_accessed=int(2 * N * C * HW * itemsize)),
    )(g, x_flat)
    return out_flat.reshape(N, C, H, W)


# --------------------------------------------------------------------------
# Plain-JAX reference (matches the PyTorch forward, f32 math)
# --------------------------------------------------------------------------

def squeeze_excite_ref(x, w1, b1, w2, b2):
    xf = x.astype(jnp.float32)
    s = jnp.mean(xf, axis=(2, 3), keepdims=True)                   # (N,C,1,1)
    h = jnp.einsum('rc,ncij->nrij', w1, s) + b1[None, :, None, None]
    h = jnp.maximum(h, 0.0)
    g = jnp.einsum('cr,nrij->ncij', w2, h) + b2[None, :, None, None]
    g = jax.nn.sigmoid(g)
    return xf * g


# --------------------------------------------------------------------------
# Self-test
# --------------------------------------------------------------------------

if __name__ == "__main__":
    def run_case(N, C, H, W, dtype, atol, rtol, **kw):
        rd = make_divisible(C * (1.0 / 16), 8, round_limit=0.0)
        key = jax.random.PRNGKey(0)
        kx, k1, k2, k3, k4 = jax.random.split(key, 5)

        x = jax.random.normal(kx, (N, C, H, W), dtype=jnp.float32).astype(dtype)
        w1 = jax.random.normal(k1, (rd, C), dtype=jnp.float32) * (1.0 / C) ** 0.5
        b1 = jax.random.normal(k2, (rd,), dtype=jnp.float32) * 0.1
        w2 = jax.random.normal(k3, (C, rd), dtype=jnp.float32) * (1.0 / rd) ** 0.5
        b2 = jax.random.normal(k4, (C,), dtype=jnp.float32) * 0.1

        out = jax.block_until_ready(squeeze_excite(x, w1, b1, w2, b2, **kw))
        ref = jax.block_until_ready(squeeze_excite_ref(x, w1, b1, w2, b2))

        assert out.shape == (N, C, H, W)
        assert jnp.allclose(out.astype(jnp.float32), ref, atol=atol, rtol=rtol), (
            f"mismatch: N={N} C={C} H={H} W={W} dtype={dtype} kw={kw}")

    # 1) Fused path, lane-dense HW (16*16 = 256), f32.
    run_case(2, 32, 16, 16, jnp.float32, atol=2e-5, rtol=2e-5)
    # 2) Fused path with non-128-multiple HW (7*7 = 49): full-extent minor
    #    block, no HBM pad/slice round trip.
    run_case(2, 32, 7, 7, jnp.float32, atol=2e-5, rtol=2e-5)
    # 3) bf16 I/O end-to-end (f32 mean accumulation + gate math).
    run_case(2, 32, 16, 16, jnp.bfloat16, atol=2e-2, rtol=2e-2)
    # 4) Ragged final batch block under the cdiv grid (N=3, batch block of 2).
    run_case(3, 32, 16, 16, jnp.float32, atol=2e-5, rtol=2e-5,
             force_batch_block=2)
    # 5) Two-phase fallback (forced), single full-extent chunk.
    run_case(2, 32, 16, 16, jnp.float32, atol=2e-5, rtol=2e-5,
             force_two_phase=True)
    # 6) Two-phase fallback with multiple chunks and a ragged (masked) tail.
    run_case(2, 16, 19, 19, jnp.float32, atol=2e-5, rtol=2e-5,
             force_two_phase=True, force_hw_block=128)

    print("KERNEL_OK")
</pallas_src>

<mosaic_0001>
module attributes {stable_mosaic.version = 11 : i64} {
  func.func @_se_fused_kernel(%arg0: i32, %arg1: memref<2x32x256xf32, #tpu.memory_space<vmem>>, %arg2: memref<32x8xf32, #tpu.memory_space<vmem>>, %arg3: memref<1x8xf32, #tpu.memory_space<vmem>>, %arg4: memref<8x32xf32, #tpu.memory_space<vmem>>, %arg5: memref<1x32xf32, #tpu.memory_space<vmem>>, %arg6: memref<2x32x256xf32, #tpu.memory_space<vmem>>) attributes {dimension_semantics = [#tpu.dimension_semantics<parallel>], iteration_bounds = array<i64: 1>, scalar_prefetch = 0 : i64, scratch_operands = 0 : i64, tpu.core_type = #tpu.core_type<tc>, window_params = [{transform_indices = @transform_0, window_bounds = array<i64: 2, 32, 256>}, {pipeline_mode = #tpu.pipeline_mode<synchronous>, transform_indices = @transform_1, window_bounds = array<i64: 32, 8>}, {pipeline_mode = #tpu.pipeline_mode<synchronous>, transform_indices = @transform_2, window_bounds = array<i64: 1, 8>}, {pipeline_mode = #tpu.pipeline_mode<synchronous>, transform_indices = @transform_3, window_bounds = array<i64: 8, 32>}, {pipeline_mode = #tpu.pipeline_mode<synchronous>, transform_indices = @transform_4, window_bounds = array<i64: 1, 32>}, {transform_indices = @transform_5, window_bounds = array<i64: 2, 32, 256>}]} {
    %c0 = arith.constant 0 : index
    %c0_0 = arith.constant 0 : index
    %c0_1 = arith.constant 0 : index
    %0 = vector.load %arg1[%c0, %c0_0, %c0_1] : memref<2x32x256xf32, #tpu.memory_space<vmem>>, vector<2x32x256xf32>
    %cst = arith.constant dense<0.000000e+00> : vector<2x32xf32>
    %1 = vector.multi_reduction <add>, %0, %cst [2] : vector<2x32x256xf32> to vector<2x32xf32>
    %cst_2 = arith.constant 3.906250e-03 : f32
    %2 = vector.broadcast %cst_2 : f32 to vector<2x32xf32>
    %3 = arith.mulf %1, %2 : vector<2x32xf32>
    %c0_3 = arith.constant 0 : index
    %c0_4 = arith.constant 0 : index
    %4 = vector.load %arg2[%c0_3, %c0_4] : memref<32x8xf32, #tpu.memory_space<vmem>>, vector<32x8xf32>
    %cst_5 = arith.constant dense<0.000000e+00> : vector<2x8xf32>
    %5 = tpu.matmul %3, %4, %cst_5 {dimension_numbers = #tpu.dot_dimension_numbers<[1], [0], [0], [1], [0, 0, 1, 1], [], []>, precision = #tpu.contract_precision<fp32>} : vector<2x32xf32>, vector<32x8xf32>, vector<2x8xf32> -> vector<2x8xf32>
    %c0_6 = arith.constant 0 : index
    %c0_7 = arith.constant 0 : index
    %6 = vector.load %arg3[%c0_6, %c0_7] : memref<1x8xf32, #tpu.memory_space<vmem>>, vector<1x8xf32>
    %7 = vector.broadcast %6 : vector<1x8xf32> to vector<2x8xf32>
    %8 = arith.addf %5, %7 : vector<2x8xf32>
    %cst_8 = arith.constant 0.000000e+00 : f32
    %9 = vector.broadcast %cst_8 : f32 to vector<2x8xf32>
    %10 = arith.maximumf %8, %9 : vector<2x8xf32>
    %c0_9 = arith.constant 0 : index
    %c0_10 = arith.constant 0 : index
    %11 = vector.load %arg4[%c0_9, %c0_10] : memref<8x32xf32, #tpu.memory_space<vmem>>, vector<8x32xf32>
    %cst_11 = arith.constant dense<0.000000e+00> : vector<2x32xf32>
    %12 = tpu.matmul %10, %11, %cst_11 {dimension_numbers = #tpu.dot_dimension_numbers<[1], [0], [0], [1], [0, 0, 1, 1], [], []>, precision = #tpu.contract_precision<fp32>} : vector<2x8xf32>, vector<8x32xf32>, vector<2x32xf32> -> vector<2x32xf32>
    %c0_12 = arith.constant 0 : index
    %c0_13 = arith.constant 0 : index
    %13 = vector.load %arg5[%c0_12, %c0_13] : memref<1x32xf32, #tpu.memory_space<vmem>>, vector<1x32xf32>
    %14 = vector.broadcast %13 : vector<1x32xf32> to vector<2x32xf32>
    %15 = arith.addf %12, %14 : vector<2x32xf32>
    %16 = arith.negf %15 : vector<2x32xf32>
    %17 = math.exp %16 : vector<2x32xf32>
    %cst_14 = arith.constant 1.000000e+00 : f32
    %18 = vector.broadcast %cst_14 : f32 to vector<2x32xf32>
    %19 = arith.addf %18, %17 : vector<2x32xf32>
    %20 = arith.divf %18, %19 : vector<2x32xf32>
    %21 = vector.shape_cast %20 : vector<2x32xf32> to vector<2x32x1xf32>
    %22 = vector.broadcast %21 : vector<2x32x1xf32> to vector<2x32x256xf32>
    %23 = arith.mulf %0, %22 : vector<2x32x256xf32>
    %c0_15 = arith.constant 0 : index
    %c0_16 = arith.constant 0 : index
    %c0_17 = arith.constant 0 : index
    %24 = vector.load %arg6[%c0_15, %c0_16, %c0_17] : memref<2x32x256xf32, #tpu.memory_space<vmem>>, vector<2x32x256xf32>
    tpu.vector_store %arg6[%c0_15, %c0_16, %c0_17], %23 {strides = array<i32>} : memref<2x32x256xf32, #tpu.memory_space<vmem>>, vector<2x32x256xf32>,
    return
  }
  func.func @transform_0(%arg0: i32) -> (i32, i32, i32) {
    %c0_i32 = arith.constant 0 : i32
    %c0_i32_0 = arith.constant 0 : i32
    %c0_i32_1 = arith.constant 0 : i32
    return %arg0, %c0_i32, %c0_i32_0 : i32, i32, i32
  }
  func.func @transform_1(%arg0: i32) -> (i32, i32) {
    %c0_i32 = arith.constant 0 : i32
    %c0_i32_0 = arith.constant 0 : i32
    %c0_i32_1 = arith.constant 0 : i32
    return %c0_i32, %c0_i32_0 : i32, i32
  }
  func.func @transform_2(%arg0: i32) -> (i32, i32) {
    %c0_i32 = arith.constant 0 : i32
    %c0_i32_0 = arith.constant 0 : i32
    %c0_i32_1 = arith.constant 0 : i32
    return %c0_i32, %c0_i32_0 : i32, i32
  }
  func.func @transform_3(%arg0: i32) -> (i32, i32) {
    %c0_i32 = arith.constant 0 : i32
    %c0_i32_0 = arith.constant 0 : i32
    %c0_i32_1 = arith.constant 0 : i32
    return %c0_i32, %c0_i32_0 : i32, i32
  }
  func.func @transform_4(%arg0: i32) -> (i32, i32) {
    %c0_i32 = arith.constant 0 : i32
    %c0_i32_0 = arith.constant 0 : i32
    %c0_i32_1 = arith.constant 0 : i32
    return %c0_i32, %c0_i32_0 : i32, i32
  }
  func.func @transform_5(%arg0: i32) -> (i32, i32, i32) {
    %c0_i32 = arith.constant 0 : i32
    %c0_i32_0 = arith.constant 0 : i32
    %c0_i32_1 = arith.constant 0 : i32
    return %arg0, %c0_i32, %c0_i32_0 : i32, i32, i32
  }
}

</mosaic_0001>

<llo_original>
// kernel: tpu_custom_call.1
$region0: #{tpu_custom_call.1}
  #allocation0 [shape = 'u32[]', space=smem, size = 0x4, offset = 0x4, fixed_abs, tag = 'smem constant byte address 0x4 - core index']
  #allocation1 [shape = 'u32[144,128]{1,0:T(1,128)}', space=vmem, size = 0x12000, scoped, tag = 'internal scratch']
  %s0 = inlined_call_operand.hbm [shape: f32[2,32,256], index: 0, kind: input, shape index: {}]
  %s1 = inlined_call_operand.vmem [shape: f32[32,8], index: 1, kind: input, shape index: {}]
  %s2 = inlined_call_operand.vmem [shape: f32[1,8], index: 2, kind: input, shape index: {}]
  %s3 = inlined_call_operand.vmem [shape: f32[8,32], index: 3, kind: input, shape index: {}]
  %s4 = inlined_call_operand.vmem [shape: f32[1,32], index: 4, kind: input, shape index: {}]
  %s5 = inlined_call_operand.hbm [shape: f32[2,32,256], index: 5, kind: output, shape index: {}]
  %s6 = sld [smem:[#allocation0]]
  $region34: #{tpu_custom_call.1} parent=0
    _
  %s8 = ssub.s32 1, %s6
  %s9 = scalar_select 0, %s8, %s6
  $region1: #{tpu_custom_call.1} parent=0
    #allocation2 [shape = 'u8[65536]{0}', space=vmem, size = 0x10000, scoped, tag = 'input window, operand 0, single buffered']
    #allocation3 [shape = 's32[1]{0}', space=sflag, size = 0x4, scoped, tag = 'scoped memory for tpu_custom_call.1']
    #allocation4 [shape = 's32[1]{0}', space=sflag, size = 0x4, scoped, tag = 'scoped memory for tpu_custom_call.1']
    #allocation5 [shape = 'u8[65536]{0}', space=vmem, size = 0x10000, scoped, tag = 'output window, operand 0, single buffered']
    %10 = vsyncpa [#allocation3], 0
    %11 = vsyncpa [#allocation4], 0
    // Predicated region
    $region2: #{tpu_custom_call.1} parent=1 // pred_check
      _
    $region3: #{tpu_custom_call.1} parent=1 // pred_check_branch
      %13 = sbr.rel (0) target = $region5
    $region4: #{tpu_custom_call.1} parent=1 // pred_region
      %s15 = ssub.s32 2048, 2048
      %16 = vsyncadd [#allocation3], %s15
      %s17 = sshll.u32 [#allocation2], 4
      %s18 = int_to_ptr.vmem [resolvable:$true] %s17
      %23 = dma.hbm_to_vmem [thread:$0]  %s0, 2048, %s18, [#allocation3], 256, 256, 16
    $region5: #{tpu_custom_call.1} parent=1 // pred_fallthru
      _
    // Predicated region
    $region6: #{tpu_custom_call.1} parent=1 // pred_check
      _
    $region7: #{tpu_custom_call.1} parent=1 // pred_check_branch
      %25 = sbr.rel (0) target = $region9
    $region8: #{tpu_custom_call.1} parent=1 // pred_region
      _
    $region9: #{tpu_custom_call.1} parent=1 // pred_fallthru
      _
    // Predicated region
    $region10: #{tpu_custom_call.1} parent=1 // pred_check
      _
    $region11: #{tpu_custom_call.1} parent=1 // pred_check_branch
      %27 = sbr.rel (0) target = $region13
    $region12: #{tpu_custom_call.1} parent=1 // pred_region
      _
    $region13: #{tpu_custom_call.1} parent=1 // pred_fallthru
      _
    // Predicated region
    $region14: #{tpu_custom_call.1} parent=1 // pred_check
      _
    $region15: #{tpu_custom_call.1} parent=1 // pred_check_branch
      %29 = sbr.rel (0) target = $region17
    $region16: #{tpu_custom_call.1} parent=1 // pred_region
      _
    $region17: #{tpu_custom_call.1} parent=1 // pred_fallthru
      _
    // Predicated region
    $region18: #{tpu_custom_call.1} parent=1 // pred_check
      _
    $region19: #{tpu_custom_call.1} parent=1 // pred_check_branch
      %31 = sbr.rel (0) target = $region21
    $region20: #{tpu_custom_call.1} parent=1 // pred_region
      _
    $region21: #{tpu_custom_call.1} parent=1 // pred_fallthru
      _
    // Predicated region
    $region22: #{tpu_custom_call.1} parent=1 // pred_check
      _
    $region23: #{tpu_custom_call.1} parent=1 // pred_check_branch
      %33 = sbr.rel (0) target = $region25
    $region24: #{tpu_custom_call.1} parent=1 // pred_region
      %34 = dma.done [#allocation3], 2048
    $region25: #{tpu_custom_call.1} parent=1 // pred_fallthru
      _
    %v35 = vld [vmem:[#allocation2] sm:$0xff]
    %v36 = vld [vmem:[#allocation2 + $0x8] sm:$0xff]
    %v37 = vld [vmem:[#allocation2 + $0x10] sm:$0xff]
    %v38 = vld [vmem:[#allocation2 + $0x18] sm:$0xff]
    %v39 = vld [vmem:[#allocation2 + $0x20] sm:$0xff]
    %v40 = vld [vmem:[#allocation2 + $0x28] sm:$0xff]
    %v41 = vld [vmem:[#allocation2 + $0x30] sm:$0xff]
    %v42 = vld [vmem:[#allocation2 + $0x38] sm:$0xff]
    %v43 = vld [vmem:[#allocation2 + $0x40] sm:$0xff]
    %v44 = vld [vmem:[#allocation2 + $0x48] sm:$0xff]
    %v45 = vld [vmem:[#allocation2 + $0x50] sm:$0xff]
    %v46 = vld [vmem:[#allocation2 + $0x58] sm:$0xff]
    %v47 = vld [vmem:[#allocation2 + $0x60] sm:$0xff]
    %v48 = vld [vmem:[#allocation2 + $0x68] sm:$0xff]
    %v49 = vld [vmem:[#allocation2 + $0x70] sm:$0xff]
    %v50 = vld [vmem:[#allocation2 + $0x78] sm:$0xff]
    %v51 = vadd.f32 %v35, %v36
    %52 = vadd.xlane.f32.xlu0 %v51
    %v53 = vpop.xlane.xlu0 %52
    %v54 = vadd.f32 %v37, %v38
    %55 = vadd.xlane.f32.xlu0 %v54
    %v56 = vpop.xlane.xlu0 %55
    %v57 = vadd.f32 %v39, %v40
    %58 = vadd.xlane.f32.xlu0 %v57
    %v59 = vpop.xlane.xlu0 %58
    %v60 = vadd.f32 %v41, %v42
    %61 = vadd.xlane.f32.xlu0 %v60
    %v62 = vpop.xlane.xlu0 %61
    %v63 = vadd.f32 %v43, %v44
    %64 = vadd.xlane.f32.xlu0 %v63
    %v65 = vpop.xlane.xlu0 %64
    %v66 = vadd.f32 %v45, %v46
    %67 = vadd.xlane.f32.xlu0 %v66
    %v68 = vpop.xlane.xlu0 %67
    %v69 = vadd.f32 %v47, %v48
    %70 = vadd.xlane.f32.xlu0 %v69
    %v71 = vpop.xlane.xlu0 %70
    %v72 = vadd.f32 %v49, %v50
    %73 = vadd.xlane.f32.xlu0 %v72
    %v74 = vpop.xlane.xlu0 %73
    %v75 = vmul.f32 %v53, 0.00390625
    %v76 = vmul.f32 %v56, 0.00390625
    %v77 = vmul.f32 %v59, 0.00390625
    %v78 = vmul.f32 %v62, 0.00390625
    %v79 = vmul.f32 %v65, 0.00390625
    %v80 = vmul.f32 %v68, 0.00390625
    %v81 = vmul.f32 %v71, 0.00390625
    %v82 = vmul.f32 %v74, 0.00390625
    %v83 = vld [vmem:[%s1] sm:$0xff]
    %v84 = vld [vmem:[%s1 + $0x8] sm:$0xff]
    %v85 = vld [vmem:[%s1 + $0x10] sm:$0xff]
    %v86 = vld [vmem:[%s1 + $0x18] sm:$0xff]
    %v87 = vld [vmem:[%s2] sm:$0x1]
    %v89 = vlaneseq
    %v90 = vshrl.u32 %v89, 7
    %v91 = vsub.s32 0, %v90
    %v92 = vrot.slane %v87, %v91
    %v102 = vlaneseq
    %v103 = vand.u32 %v102, 127
    %v104 = vlaneseq
    %v105 = vshrl.u32 %v104, 7
    %v106 = vsub.s32 %v103, %v105
    %v107 = vrot.slane %v75, %v106
    %v108 = vadd.s32 %v103, 4294967288
    %v109 = vlaneseq
    %v110 = vshrl.u32 %v109, 7
    %v111 = vsub.s32 %v108, %v110
    %v112 = vrot.slane %v76, %v111
    %vm113 = vcmask 130112
    %v114 = vsel %vm113, %v112, %v107
    %v115 = vadd.s32 %v103, 4294967280
    %v116 = vlaneseq
    %v117 = vshrl.u32 %v116, 7
    %v118 = vsub.s32 %v115, %v117
    %v119 = vrot.slane %v77, %v118
    %vm120 = vcmask 195712
    %v121 = vsel %vm120, %v119, %v114
    %v122 = vadd.s32 %v103, 4294967272
    %v123 = vlaneseq
    %v124 = vshrl.u32 %v123, 7
    %v125 = vsub.s32 %v122, %v124
    %v126 = vrot.slane %v78, %v125
    %vm127 = vcmask 261312
    %v128 = vsel %vm127, %v126, %v121
    %v129 = vlaneseq
    %v130 = vshrl.u32 %v129, 7
    %v131 = vsub.s32 %v103, %v130
    %v132 = vrot.slane %v79, %v131
    %v133 = vlaneseq
    %v134 = vshrl.u32 %v133, 7
    %v135 = vsub.s32 %v108, %v134
    %v136 = vrot.slane %v80, %v135
    %v137 = vsel %vm113, %v136, %v132
    %v138 = vlaneseq
    %v139 = vshrl.u32 %v138, 7
    %v140 = vsub.s32 %v115, %v139
    %v141 = vrot.slane %v81, %v140
    %v142 = vsel %vm120, %v141, %v137
    %v143 = vlaneseq
    %v144 = vshrl.u32 %v143, 7
    %v145 = vsub.s32 %v122, %v144
    %v146 = vrot.slane %v82, %v145
    %v147 = vsel %vm127, %v146, %v142
    %vm148 = vcmask 1041409
    %v149 = vsel %vm148, %v147, %v128
    %vm150 = vcmask 261120
    %v151 = vsel %vm150, %v149, 0
    %153 = vmatprep.subr.mxu0 0.0
    %v154 = vand.u32 %v83, 4294901760
    %155 = vmatpush1.msra.mxu0 %v154
    %156 = vmatprep.subr.mxu0 0.0
    %v157 = vand.u32 %v84, 4294901760
    %158 = vmatpush1.msra.mxu0 %v157
    %159 = vmatprep.subr.mxu0 0.0
    %v160 = vand.u32 %v85, 4294901760
    %161 = vmatpush1.msra.mxu0 %v160
    %162 = vmatprep.subr.mxu0 0.0
    %v163 = vand.u32 %v86, 4294901760
    %164 = vmatpush1.msra.mxu0 %v163
    %165 = vmatprep.subr.mxu0 0.0
    %166 = vmatpush1.msra.mxu0 0.0
    %167 = vmatprep.subr.mxu0 0.0
    %168 = vmatpush1.msra.mxu0 0.0
    %169 = vmatprep.subr.mxu0 0.0
    %170 = vmatpush1.msra.mxu0 0.0
    %171 = vmatprep.subr.mxu0 0.0
    %172 = vmatpush1.msra.mxu0 0.0
    %173 = vmatprep.subr.mxu0 0.0
    %174 = vmatpush1.msra.mxu0 0.0
    %175 = vmatprep.subr.mxu0 0.0
    %176 = vmatpush1.msra.mxu0 0.0
    %177 = vmatprep.subr.mxu0 0.0
    %178 = vmatpush1.msra.mxu0 0.0
    %179 = vmatprep.subr.mxu0 0.0
    %180 = vmatpush1.msra.mxu0 0.0
    %181 = vmatprep.subr.mxu0 0.0
    %182 = vmatpush1.msra.mxu0 0.0
    %183 = vmatprep.subr.mxu0 0.0
    %184 = vmatpush1.msra.mxu0 0.0
    %185 = vmatprep.subr.mxu0 0.0
    %186 = vmatpush1.msra.mxu0 0.0
    %187 = vmatprep.subr.mxu0 0.0
    %188 = vmatpush1.msra.mxu0 0.0
    %189 = vmatprep.subr.mxu0 0.0
    %190 = vmatpush1.msra.mxu0 0.0
    %191 = vmatprep.subr.mxu0 0.0
    %192 = vmatpush1.msra.mxu0 0.0
    %193 = vmatprep.subr.mxu0 0.0
    %194 = vmatpush1.msra.mxu0 0.0
    %195 = vmatprep.subr.mxu0 0.0
    %196 = vmatpush1.msra.mxu0 0.0
    %197 = vmatprep.subr.mxu0 0.0
    %198 = vmatpush1.msra.mxu0 0.0
    %199 = vmatprep.subr.mxu0 0.0
    %200 = vmatpush1.msra.mxu0 0.0
    %201 = vmatprep.subr.mxu0 0.0
    %202 = vmatpush1.msra.mxu0 0.0
    %203 = vmatprep.subr.mxu0 0.0
    %204 = vmatpush1.msra.mxu0 0.0
    %205 = vmatprep.subr.mxu0 0.0
    %206 = vmatpush1.msra.mxu0 0.0
    %207 = vmatprep.subr.mxu0 0.0
    %208 = vmatpush1.msra.mxu0 0.0
    %209 = vmatprep.subr.mxu0 0.0
    %210 = vmatpush1.msra.mxu0 0.0
    %211 = vmatprep.subr.mxu0 0.0
    %212 = vmatpush1.msra.mxu0 0.0
    %213 = vmatprep.subr.mxu0 0.0
    %214 = vmatpush1.msra.mxu0 0.0
    %215 = vmatprep.subr.mxu0 0.0
    %216 = vmatpush1.msra.mxu0 0.0
    %217 = vmatprep.subr.mxu0 0.0
    %218 = vmatpush1.msra.mxu0 0.0
    %219 = vmatprep.subr.mxu0 0.0
    %220 = vmatpush1.msra.mxu0 0.0
    %221 = vmatprep.mubr.f32.mxu0 0.0
    %v222 = vand.u32 %v151, 4294901760
    %v223 = vsub.f32 %v151, %v222
    %v224 = vand.u32 %v223, 4294901760
    %v225 = vsub.f32 %v223, %v224
    %v226 = vand.u32 %v225, 4294901760
    %227 = vmatmul.mubr.f32.gmra.mrb[0].mxu0 %v226
    %v228 = vpop.f32.mrb[0].mxu0
    %v229 = vadd.f32 %v92, %v228
    %v230 = vpop.f32.mrb[0].mxu0
    %231 = vdwg.mxu0
    %232 = vmatprep.subr.mxu0 0.0
    %v233 = vand.u32 %v83, 4294901760
    %v234 = vsub.f32 %v83, %v233
    %v235 = vand.u32 %v234, 4294901760
    %v236 = vsub.f32 %v234, %v235
    %v237 = vand.u32 %v236, 4294901760
    %238 = vmatpush1.msra.mxu0 %v237
    %239 = vmatprep.subr.mxu0 0.0
    %v240 = vand.u32 %v84, 4294901760
    %v241 = vsub.f32 %v84, %v240
    %v242 = vand.u32 %v241, 4294901760
    %v243 = vsub.f32 %v241, %v242
    %v244 = vand.u32 %v243, 4294901760
    %245 = vmatpush1.msra.mxu0 %v244
    %246 = vmatprep.subr.mxu0 0.0
    %v247 = vand.u32 %v85, 4294901760
    %v248 = vsub.f32 %v85, %v247
    %v249 = vand.u32 %v248, 4294901760
    %v250 = vsub.f32 %v248, %v249
    %v251 = vand.u32 %v250, 4294901760
    %252 = vmatpush1.msra.mxu0 %v251
    %253 = vmatprep.subr.mxu0 0.0
    %v254 = vand.u32 %v86, 4294901760
    %v255 = vsub.f32 %v86, %v254
    %v256 = vand.u32 %v255, 4294901760
    %v257 = vsub.f32 %v255, %v256
    %v258 = vand.u32 %v257, 4294901760
    %259 = vmatpush1.msra.mxu0 %v258
    %260 = vmatprep.subr.mxu0 0.0
    %261 = vmatpush1.msra.mxu0 0.0
    %262 = vmatprep.subr.mxu0 0.0
    %263 = vmatpush1.msra.mxu0 0.0
    %264 = vmatprep.subr.mxu0 0.0
    %265 = vmatpush1.msra.mxu0 0.0
    %266 = vmatprep.subr.mxu0 0.0
    %267 = vmatpush1.msra.mxu0 0.0
    %268 = vmatprep.subr.mxu0 0.0
    %269 = vmatpush1.msra.mxu0 0.0
    %270 = vmatprep.subr.mxu0 0.0
    %271 = vmatpush1.msra.mxu0 0.0
    %272 = vmatprep.subr.mxu0 0.0
    %273 = vmatpush1.msra.mxu0 0.0
    %274 = vmatprep.subr.mxu0 0.0
    %275 = vmatpush1.msra.mxu0 0.0
    %276 = vmatprep.subr.mxu0 0.0
    %277 = vmatpush1.msra.mxu0 0.0
    %278 = vmatprep.subr.mxu0 0.0
    %279 = vmatpush1.msra.mxu0 0.0
    %280 = vmatprep.subr.mxu0 0.0
    %281 = vmatpush1.msra.mxu0 0.0
    %282 = vmatprep.subr.mxu0 0.0
    %283 = vmatpush1.msra.mxu0 0.0
    %284 = vmatprep.subr.mxu0 0.0
    %285 = vmatpush1.msra.mxu0 0.0
    %286 = vmatprep.subr.mxu0 0.0
    %287 = vmatpush1.msra.mxu0 0.0
    %288 = vmatprep.subr.mxu0 0.0
    %289 = vmatpush1.msra.mxu0 0.0
    %290 = vmatprep.subr.mxu0 0.0
    %291 = vmatpush1.msra.mxu0 0.0
    %292 = vmatprep.subr.mxu0 0.0
    %293 = vmatpush1.msra.mxu0 0.0
    %294 = vmatprep.subr.mxu0 0.0
    %295 = vmatpush1.msra.mxu0 0.0
    %296 = vmatprep.subr.mxu0 0.0
    %297 = vmatpush1.msra.mxu0 0.0
    %298 = vmatprep.subr.mxu0 0.0
    %299 = vmatpush1.msra.mxu0 0.0
    %300 = vmatprep.subr.mxu0 0.0
    %301 = vmatpush1.msra.mxu0 0.0
    %302 = vmatprep.subr.mxu0 0.0
    %303 = vmatpush1.msra.mxu0 0.0
    %304 = vmatprep.subr.mxu0 0.0
    %305 = vmatpush1.msra.mxu0 0.0
    %306 = vmatprep.subr.mxu0 0.0
    %307 = vmatpush1.msra.mxu0 0.0
    %308 = vmatprep.subr.mxu0 0.0
    %309 = vmatpush1.msra.mxu0 0.0
    %310 = vmatprep.subr.mxu0 0.0
    %311 = vmatpush1.msra.mxu0 0.0
    %312 = vmatprep.subr.mxu0 0.0
    %313 = vmatpush1.msra.mxu0 0.0
    %314 = vmatprep.subr.mxu0 0.0
    %315 = vmatpush1.msra.mxu0 0.0
    %316 = vmatprep.mubr.f32.mxu0 0.0
    %v317 = vand.u32 %v151, 4294901760
    %318 = vmatmul.mubr.f32.gmra.mrb[0].mxu0 %v317
    %v319 = vpop.f32.mrb[0].mxu0
    %v320 = vadd.f32 %v229, %v319
    %v321 = vpop.f32.mrb[0].mxu0
    %322 = vdwg.mxu0
    %323 = vmatprep.subr.mxu0 0.0
    %v324 = vand.u32 %v83, 4294901760
    %v325 = vsub.f32 %v83, %v324
    %326 = vmatpush1.msra.mxu0 %v325
    %327 = vmatprep.subr.mxu0 0.0
    %v328 = vand.u32 %v84, 4294901760
    %v329 = vsub.f32 %v84, %v328
    %330 = vmatpush1.msra.mxu0 %v329
    %331 = vmatprep.subr.mxu0 0.0
    %v332 = vand.u32 %v85, 4294901760
    %v333 = vsub.f32 %v85, %v332
    %334 = vmatpush1.msra.mxu0 %v333
    %335 = vmatprep.subr.mxu0 0.0
    %v336 = vand.u32 %v86, 4294901760
    %v337 = vsub.f32 %v86, %v336
    %338 = vmatpush1.msra.mxu0 %v337
    %339 = vmatprep.subr.mxu0 0.0
    %340 = vmatpush1.msra.mxu0 0.0
    %341 = vmatprep.subr.mxu0 0.0
    %342 = vmatpush1.msra.mxu0 0.0
    %343 = vmatprep.subr.mxu0 0.0
    %344 = vmatpush1.msra.mxu0 0.0
    %345 = vmatprep.subr.mxu0 0.0
    %346 = vmatpush1.msra.mxu0 0.0
    %347 = vmatprep.subr.mxu0 0.0
    %348 = vmatpush1.msra.mxu0 0.0
    %349 = vmatprep.subr.mxu0 0.0
    %350 = vmatpush1.msra.mxu0 0.0
    %351 = vmatprep.subr.mxu0 0.0
    %352 = vmatpush1.msra.mxu0 0.0
    %353 = vmatprep.subr.mxu0 0.0
    %354 = vmatpush1.msra.mxu0 0.0
    %355 = vmatprep.subr.mxu0 0.0
    %356 = vmatpush1.msra.mxu0 0.0
    %357 = vmatprep.subr.mxu0 0.0
    %358 = vmatpush1.msra.mxu0 0.0
    %359 = vmatprep.subr.mxu0 0.0
    %360 = vmatpush1.msra.mxu0 0.0
    %361 = vmatprep.subr.mxu0 0.0
    %362 = vmatpush1.msra.mxu0 0.0
    %363 = vmatprep.subr.mxu0 0.0
    %364 = vmatpush1.msra.mxu0 0.0
    %365 = vmatprep.subr.mxu0 0.0
    %366 = vmatpush1.msra.mxu0 0.0
    %367 = vmatprep.subr.mxu0 0.0
    %368 = vmatpush1.msra.mxu0 0.0
    %369 = vmatprep.subr.mxu0 0.0
    %370 = vmatpush1.msra.mxu0 0.0
    %371 = vmatprep.subr.mxu0 0.0
    %372 = vmatpush1.msra.mxu0 0.0
    %373 = vmatprep.subr.mxu0 0.0
    %374 = vmatpush1.msra.mxu0 0.0
    %375 = vmatprep.subr.mxu0 0.0
    %376 = vmatpush1.msra.mxu0 0.0
    %377 = vmatprep.subr.mxu0 0.0
    %378 = vmatpush1.msra.mxu0 0.0
    %379 = vmatprep.subr.mxu0 0.0
    %380 = vmatpush1.msra.mxu0 0.0
    %381 = vmatprep.subr.mxu0 0.0
    %382 = vmatpush1.msra.mxu0 0.0
    %383 = vmatprep.subr.mxu0 0.0
    %384 = vmatpush1.msra.mxu0 0.0
    %385 = vmatprep.subr.mxu0 0.0
    %386 = vmatpush1.msra.mxu0 0.0
    %387 = vmatprep.subr.mxu0 0.0
    %388 = vmatpush1.msra.mxu0 0.0
    %389 = vmatprep.subr.mxu0 0.0
    %390 = vmatpush1.msra.mxu0 0.0
    %391 = vmatprep.subr.mxu0 0.0
    %392 = vmatpush1.msra.mxu0 0.0
    %393 = vmatprep.subr.mxu0 0.0
    %394 = vmatpush1.msra.mxu0 0.0
    %395 = vmatprep.mubr.f32.mxu0 0.0
    %v396 = vand.u32 %v151, 4294901760
    %v397 = vsub.f32 %v151, %v396
    %398 = vmatmul.mubr.f32.gmra.mrb[0].mxu0 %v397
    %v399 = vpop.f32.mrb[0].mxu0
    %v400 = vadd.f32 %v320, %v399
    %v401 = vpop.f32.mrb[0].mxu0
    %402 = vdwg.mxu0
    %403 = vmatprep.subr.mxu0 0.0
    %v404 = vand.u32 %v83, 4294901760
    %405 = vmatpush1.msra.mxu0 %v404
    %406 = vmatprep.subr.mxu0 0.0
    %v407 = vand.u32 %v84, 4294901760
    %408 = vmatpush1.msra.mxu0 %v407
    %409 = vmatprep.subr.mxu0 0.0
    %v410 = vand.u32 %v85, 4294901760
    %411 = vmatpush1.msra.mxu0 %v410
    %412 = vmatprep.subr.mxu0 0.0
    %v413 = vand.u32 %v86, 4294901760
    %414 = vmatpush1.msra.mxu0 %v413
    %415 = vmatprep.subr.mxu0 0.0
    %416 = vmatpush1.msra.mxu0 0.0
    %417 = vmatprep.subr.mxu0 0.0
    %418 = vmatpush1.msra.mxu0 0.0
    %419 = vmatprep.subr.mxu0 0.0
    %420 = vmatpush1.msra.mxu0 0.0
    %421 = vmatprep.subr.mxu0 0.0
    %422 = vmatpush1.msra.mxu0 0.0
    %423 = vmatprep.subr.mxu0 0.0
    %424 = vmatpush1.msra.mxu0 0.0
    %425 = vmatprep.subr.mxu0 0.0
    %426 = vmatpush1.msra.mxu0 0.0
    %427 = vmatprep.subr.mxu0 0.0
    %428 = vmatpush1.msra.mxu0 0.0
    %429 = vmatprep.subr.mxu0 0.0
    %430 = vmatpush1.msra.mxu0 0.0
    %431 = vmatprep.subr.mxu0 0.0
    %432 = vmatpush1.msra.mxu0 0.0
    %433 = vmatprep.subr.mxu0 0.0
    %434 = vmatpush1.msra.mxu0 0.0
    %435 = vmatprep.subr.mxu0 0.0
    %436 = vmatpush1.msra.mxu0 0.0
    %437 = vmatprep.subr.mxu0 0.0
    %438 = vmatpush1.msra.mxu0 0.0
    %439 = vmatprep.subr.mxu0 0.0
    %440 = vmatpush1.msra.mxu0 0.0
    %441 = vmatprep.subr.mxu0 0.0
    %442 = vmatpush1.msra.mxu0 0.0
    %443 = vmatprep.subr.mxu0 0.0
    %444 = vmatpush1.msra.mxu0 0.0
    %445 = vmatprep.subr.mxu0 0.0
    %446 = vmatpush1.msra.mxu0 0.0
    %447 = vmatprep.subr.mxu0 0.0
    %448 = vmatpush1.msra.mxu0 0.0
    %449 = vmatprep.subr.mxu0 0.0
    %450 = vmatpush1.msra.mxu0 0.0
    %451 = vmatprep.subr.mxu0 0.0
    %452 = vmatpush1.msra.mxu0 0.0
    %453 = vmatprep.subr.mxu0 0.0
    %454 = vmatpush1.msra.mxu0 0.0
    %455 = vmatprep.subr.mxu0 0.0
    %456 = vmatpush1.msra.mxu0 0.0
    %457 = vmatprep.subr.mxu0 0.0
    %458 = vmatpush1.msra.mxu0 0.0
    %459 = vmatprep.subr.mxu0 0.0
    %460 = vmatpush1.msra.mxu0 0.0
    %461 = vmatprep.subr.mxu0 0.0
    %462 = vmatpush1.msra.mxu0 0.0
    %463 = vmatprep.subr.mxu0 0.0
    %464 = vmatpush1.msra.mxu0 0.0
    %465 = vmatprep.subr.mxu0 0.0
    %466 = vmatpush1.msra.mxu0 0.0
    %467 = vmatprep.subr.mxu0 0.0
    %468 = vmatpush1.msra.mxu0 0.0
    %469 = vmatprep.subr.mxu0 0.0
    %470 = vmatpush1.msra.mxu0 0.0
    %471 = vmatprep.mubr.f32.mxu0 0.0
    %v472 = vand.u32 %v151, 4294901760
    %v473 = vsub.f32 %v151, %v472
    %v474 = vand.u32 %v473, 4294901760
    %475 = vmatmul.mubr.f32.gmra.mrb[0].mxu0 %v474
    %v476 = vpop.f32.mrb[0].mxu0
    %v477 = vadd.f32 %v400, %v476
    %v478 = vpop.f32.mrb[0].mxu0
    %479 = vdwg.mxu0
    %480 = vmatprep.subr.mxu0 0.0
    %v481 = vand.u32 %v83, 4294901760
    %v482 = vsub.f32 %v83, %v481
    %v483 = vand.u32 %v482, 4294901760
    %484 = vmatpush1.msra.mxu0 %v483
    %485 = vmatprep.subr.mxu0 0.0
    %v486 = vand.u32 %v84, 4294901760
    %v487 = vsub.f32 %v84, %v486
    %v488 = vand.u32 %v487, 4294901760
    %489 = vmatpush1.msra.mxu0 %v488
    %490 = vmatprep.subr.mxu0 0.0
    %v491 = vand.u32 %v85, 4294901760
    %v492 = vsub.f32 %v85, %v491
    %v493 = vand.u32 %v492, 4294901760
    %494 = vmatpush1.msra.mxu0 %v493
    %495 = vmatprep.subr.mxu0 0.0
    %v496 = vand.u32 %v86, 4294901760
    %v497 = vsub.f32 %v86, %v496
    %v498 = vand.u32 %v497, 4294901760
    %499 = vmatpush1.msra.mxu0 %v498
    %500 = vmatprep.subr.mxu0 0.0
    %501 = vmatpush1.msra.mxu0 0.0
    %502 = vmatprep.subr.mxu0 0.0
    %503 = vmatpush1.msra.mxu0 0.0
    %504 = vmatprep.subr.mxu0 0.0
    %505 = vmatpush1.msra.mxu0 0.0
    %506 = vmatprep.subr.mxu0 0.0
    %507 = vmatpush1.msra.mxu0 0.0
    %508 = vmatprep.subr.mxu0 0.0
    %509 = vmatpush1.msra.mxu0 0.0
    %510 = vmatprep.subr.mxu0 0.0
    %511 = vmatpush1.msra.mxu0 0.0
    %512 = vmatprep.subr.mxu0 0.0
    %513 = vmatpush1.msra.mxu0 0.0
    %514 = vmatprep.subr.mxu0 0.0
    %515 = vmatpush1.msra.mxu0 0.0
    %516 = vmatprep.subr.mxu0 0.0
    %517 = vmatpush1.msra.mxu0 0.0
    %518 = vmatprep.subr.mxu0 0.0
    %519 = vmatpush1.msra.mxu0 0.0
    %520 = vmatprep.subr.mxu0 0.0
    %521 = vmatpush1.msra.mxu0 0.0
    %522 = vmatprep.subr.mxu0 0.0
    %523 = vmatpush1.msra.mxu0 0.0
    %524 = vmatprep.subr.mxu0 0.0
    %525 = vmatpush1.msra.mxu0 0.0
    %526 = vmatprep.subr.mxu0 0.0
    %527 = vmatpush1.msra.mxu0 0.0
    %528 = vmatprep.subr.mxu0 0.0
    %529 = vmatpush1.msra.mxu0 0.0
    %530 = vmatprep.subr.mxu0 0.0
    %531 = vmatpush1.msra.mxu0 0.0
    %532 = vmatprep.subr.mxu0 0.0
    %533 = vmatpush1.msra.mxu0 0.0
    %534 = vmatprep.subr.mxu0 0.0
    %535 = vmatpush1.msra.mxu0 0.0
    %536 = vmatprep.subr.mxu0 0.0
    %537 = vmatpush1.msra.mxu0 0.0
    %538 = vmatprep.subr.mxu0 0.0
    %539 = vmatpush1.msra.mxu0 0.0
    %540 = vmatprep.subr.mxu0 0.0
    %541 = vmatpush1.msra.mxu0 0.0
    %542 = vmatprep.subr.mxu0 0.0
    %543 = vmatpush1.msra.mxu0 0.0
    %544 = vmatprep.subr.mxu0 0.0
    %545 = vmatpush1.msra.mxu0 0.0
    %546 = vmatprep.subr.mxu0 0.0
    %547 = vmatpush1.msra.mxu0 0.0
    %548 = vmatprep.subr.mxu0 0.0
    %549 = vmatpush1.msra.mxu0 0.0
    %550 = vmatprep.subr.mxu0 0.0
    %551 = vmatpush1.msra.mxu0 0.0
    %552 = vmatprep.subr.mxu0 0.0
    %553 = vmatpush1.msra.mxu0 0.0
    %554 = vmatprep.subr.mxu0 0.0
    %555 = vmatpush1.msra.mxu0 0.0
    %556 = vmatprep.mubr.f32.mxu0 0.0
    %v557 = vand.u32 %v151, 4294901760
    %558 = vmatmul.mubr.f32.gmra.mrb[0].mxu0 %v557
    %v559 = vpop.f32.mrb[0].mxu0
    %v560 = vadd.f32 %v477, %v559
    %v561 = vpop.f32.mrb[0].mxu0
    %562 = vdwg.mxu0
    %563 = vmatprep.subr.mxu0 0.0
    %v564 = vand.u32 %v83, 4294901760
    %565 = vmatpush1.msra.mxu0 %v564
    %566 = vmatprep.subr.mxu0 0.0
    %v567 = vand.u32 %v84, 4294901760
    %568 = vmatpush1.msra.mxu0 %v567
    %569 = vmatprep.subr.mxu0 0.0
    %v570 = vand.u32 %v85, 4294901760
    %571 = vmatpush1.msra.mxu0 %v570
    %572 = vmatprep.subr.mxu0 0.0
    %v573 = vand.u32 %v86, 4294901760
    %574 = vmatpush1.msra.mxu0 %v573
    %575 = vmatprep.subr.mxu0 0.0
    %576 = vmatpush1.msra.mxu0 0.0
    %577 = vmatprep.subr.mxu0 0.0
    %578 = vmatpush1.msra.mxu0 0.0
    %579 = vmatprep.subr.mxu0 0.0
    %580 = vmatpush1.msra.mxu0 0.0
    %581 = vmatprep.subr.mxu0 0.0
    %582 = vmatpush1.msra.mxu0 0.0
    %583 = vmatprep.subr.mxu0 0.0
    %584 = vmatpush1.msra.mxu0 0.0
    %585 = vmatprep.subr.mxu0 0.0
    %586 = vmatpush1.msra.mxu0 0.0
    %587 = vmatprep.subr.mxu0 0.0
    %588 = vmatpush1.msra.mxu0 0.0
    %589 = vmatprep.subr.mxu0 0.0
    %590 = vmatpush1.msra.mxu0 0.0
    %591 = vmatprep.subr.mxu0 0.0
    %592 = vmatpush1.msra.mxu0 0.0
    %593 = vmatprep.subr.mxu0 0.0
    %594 = vmatpush1.msra.mxu0 0.0
    %595 = vmatprep.subr.mxu0 0.0
    %596 = vmatpush1.msra.mxu0 0.0
    %597 = vmatprep.subr.mxu0 0.0
    %598 = vmatpush1.msra.mxu0 0.0
    %599 = vmatprep.subr.mxu0 0.0
    %600 = vmatpush1.msra.mxu0 0.0
    %601 = vmatprep.subr.mxu0 0.0
    %602 = vmatpush1.msra.mxu0 0.0
    %603 = vmatprep.subr.mxu0 0.0
    %604 = vmatpush1.msra.mxu0 0.0
    %605 = vmatprep.subr.mxu0 0.0
    %606 = vmatpush1.msra.mxu0 0.0
    %607 = vmatprep.subr.mxu0 0.0
    %608 = vmatpush1.msra.mxu0 0.0
    %609 = vmatprep.subr.mxu0 0.0
    %610 = vmatpush1.msra.mxu0 0.0
    %611 = vmatprep.subr.mxu0 0.0
    %612 = vmatpush1.msra.mxu0 0.0
    %613 = vmatprep.subr.mxu0 0.0
    %614 = vmatpush1.msra.mxu0 0.0
    %615 = vmatprep.subr.mxu0 0.0
    %616 = vmatpush1.msra.mxu0 0.0
    %617 = vmatprep.subr.mxu0 0.0
    %618 = vmatpush1.msra.mxu0 0.0
    %619 = vmatprep.subr.mxu0 0.0
    %620 = vmatpush1.msra.mxu0 0.0
    %621 = vmatprep.subr.mxu0 0.0
    %622 = vmatpush1.msra.mxu0 0.0
    %623 = vmatprep.subr.mxu0 0.0
    %624 = vmatpush1.msra.mxu0 0.0
    %625 = vmatprep.subr.mxu0 0.0
    %626 = vmatpush1.msra.mxu0 0.0
    %627 = vmatprep.subr.mxu0 0.0
    %628 = vmatpush1.msra.mxu0 0.0
    %629 = vmatprep.subr.mxu0 0.0
    %630 = vmatpush1.msra.mxu0 0.0
    %631 = vmatprep.mubr.f32.mxu0 0.0
    %v632 = vand.u32 %v151, 4294901760
    %633 = vmatmul.mubr.f32.gmra.mrb[0].mxu0 %v632
    %v634 = vpop.f32.mrb[0].mxu0
    %v635 = vadd.f32 %v560, %v634
    %v636 = vpop.f32.mrb[0].mxu0
    %637 = vdwg.mxu0
    %v638 = vmax.f32 %v635, 0.0
    %v639 = vld [vmem:[%s3] sm:$0xff]
    %v640 = vld [vmem:[%s4] sm:$0x1]
    %v642 = vlaneseq
    %v643 = vshrl.u32 %v642, 7
    %v644 = vsub.s32 0, %v643
    %v645 = vrot.slane %v640, %v644
    %vm647 = vcmask 64512
    %v649 = vsel %vm647, %v638, 0
    %651 = vmatprep.subr.mxu0 0.0
    %v652 = vand.u32 %v639, 4294901760
    %653 = vmatpush1.msra.mxu0 %v652
    %654 = vmatprep.subr.mxu0 0.0
    %655 = vmatpush1.msra.mxu0 0.0
    %656 = vmatprep.subr.mxu0 0.0
    %657 = vmatpush1.msra.mxu0 0.0
    %658 = vmatprep.subr.mxu0 0.0
    %659 = vmatpush1.msra.mxu0 0.0
    %660 = vmatprep.subr.mxu0 0.0
    %661 = vmatpush1.msra.mxu0 0.0
    %662 = vmatprep.subr.mxu0 0.0
    %663 = vmatpush1.msra.mxu0 0.0
    %664 = vmatprep.subr.mxu0 0.0
    %665 = vmatpush1.msra.mxu0 0.0
    %666 = vmatprep.subr.mxu0 0.0
    %667 = vmatpush1.msra.mxu0 0.0
    %668 = vmatprep.subr.mxu0 0.0
    %669 = vmatpush1.msra.mxu0 0.0
    %670 = vmatprep.subr.mxu0 0.0
    %671 = vmatpush1.msra.mxu0 0.0
    %672 = vmatprep.subr.mxu0 0.0
    %673 = vmatpush1.msra.mxu0 0.0
    %674 = vmatprep.subr.mxu0 0.0
    %675 = vmatpush1.msra.mxu0 0.0
    %676 = vmatprep.subr.mxu0 0.0
    %677 = vmatpush1.msra.mxu0 0.0
    %678 = vmatprep.subr.mxu0 0.0
    %679 = vmatpush1.msra.mxu0 0.0
    %680 = vmatprep.subr.mxu0 0.0
    %681 = vmatpush1.msra.mxu0 0.0
    %682 = vmatprep.subr.mxu0 0.0
    %683 = vmatpush1.msra.mxu0 0.0
    %684 = vmatprep.subr.mxu0 0.0
    %685 = vmatpush1.msra.mxu0 0.0
    %686 = vmatprep.subr.mxu0 0.0
    %687 = vmatpush1.msra.mxu0 0.0
    %688 = vmatprep.subr.mxu0 0.0
    %689 = vmatpush1.msra.mxu0 0.0
    %690 = vmatprep.subr.mxu0 0.0
    %691 = vmatpush1.msra.mxu0 0.0
    %692 = vmatprep.subr.mxu0 0.0
    %693 = vmatpush1.msra.mxu0 0.0
    %694 = vmatprep.subr.mxu0 0.0
    %695 = vmatpush1.msra.mxu0 0.0
    %696 = vmatprep.subr.mxu0 0.0
    %697 = vmatpush1.msra.mxu0 0.0
    %698 = vmatprep.subr.mxu0 0.0
    %699 = vmatpush1.msra.mxu0 0.0
    %700 = vmatprep.subr.mxu0 0.0
    %701 = vmatpush1.msra.mxu0 0.0
    %702 = vmatprep.subr.mxu0 0.0
    %703 = vmatpush1.msra.mxu0 0.0
    %704 = vmatprep.subr.mxu0 0.0
    %705 = vmatpush1.msra.mxu0 0.0
    %706 = vmatprep.subr.mxu0 0.0
    %707 = vmatpush1.msra.mxu0 0.0
    %708 = vmatprep.subr.mxu0 0.0
    %709 = vmatpush1.msra.mxu0 0.0
    %710 = vmatprep.subr.mxu0 0.0
    %711 = vmatpush1.msra.mxu0 0.0
    %712 = vmatprep.subr.mxu0 0.0
    %713 = vmatpush1.msra.mxu0 0.0
    %714 = vmatprep.subr.mxu0 0.0
    %715 = vmatpush1.msra.mxu0 0.0
    %716 = vmatprep.mubr.f32.mxu0 0.0
    %v717 = vand.u32 %v649, 4294901760
    %v718 = vsub.f32 %v649, %v717
    %v719 = vand.u32 %v718, 4294901760
    %v720 = vsub.f32 %v718, %v719
    %v721 = vand.u32 %v720, 4294901760
    %722 = vmatmul.mubr.f32.gmra.mrb[0].mxu0 %v721
    %v723 = vpop.f32.mrb[0].mxu0
    %v724 = vadd.f32 %v645, %v723
    %v725 = vpop.f32.mrb[0].mxu0
    %726 = vdwg.mxu0
    %727 = vmatprep.subr.mxu0 0.0
    %v728 = vand.u32 %v639, 4294901760
    %v729 = vsub.f32 %v639, %v728
    %v730 = vand.u32 %v729, 4294901760
    %v731 = vsub.f32 %v729, %v730
    %v732 = vand.u32 %v731, 4294901760
    %733 = vmatpush1.msra.mxu0 %v732
    %734 = vmatprep.subr.mxu0 0.0
    %735 = vmatpush1.msra.mxu0 0.0
    %736 = vmatprep.subr.mxu0 0.0
    %737 = vmatpush1.msra.mxu0 0.0
    %738 = vmatprep.subr.mxu0 0.0
    %739 = vmatpush1.msra.mxu0 0.0
    %740 = vmatprep.subr.mxu0 0.0
    %741 = vmatpush1.msra.mxu0 0.0
    %742 = vmatprep.subr.mxu0 0.0
    %743 = vmatpush1.msra.mxu0 0.0
    %744 = vmatprep.subr.mxu0 0.0
    %745 = vmatpush1.msra.mxu0 0.0
    %746 = vmatprep.subr.mxu0 0.0
    %747 = vmatpush1.msra.mxu0 0.0
    %748 = vmatprep.subr.mxu0 0.0
    %749 = vmatpush1.msra.mxu0 0.0
    %750 = vmatprep.subr.mxu0 0.0
    %751 = vmatpush1.msra.mxu0 0.0
    %752 = vmatprep.subr.mxu0 0.0
    %753 = vmatpush1.msra.mxu0 0.0
    %754 = vmatprep.subr.mxu0 0.0
    %755 = vmatpush1.msra.mxu0 0.0
    %756 = vmatprep.subr.mxu0 0.0
    %757 = vmatpush1.msra.mxu0 0.0
    %758 = vmatprep.subr.mxu0 0.0
    %759 = vmatpush1.msra.mxu0 0.0
    %760 = vmatprep.subr.mxu0 0.0
    %761 = vmatpush1.msra.mxu0 0.0
    %762 = vmatprep.subr.mxu0 0.0
    %763 = vmatpush1.msra.mxu0 0.0
    %764 = vmatprep.subr.mxu0 0.0
    %765 = vmatpush1.msra.mxu0 0.0
    %766 = vmatprep.subr.mxu0 0.0
    %767 = vmatpush1.msra.mxu0 0.0
    %768 = vmatprep.subr.mxu0 0.0
    %769 = vmatpush1.msra.mxu0 0.0
    %770 = vmatprep.subr.mxu0 0.0
    %771 = vmatpush1.msra.mxu0 0.0
    %772 = vmatprep.subr.mxu0 0.0
    %773 = vmatpush1.msra.mxu0 0.0
    %774 = vmatprep.subr.mxu0 0.0
    %775 = vmatpush1.msra.mxu0 0.0
    %776 = vmatprep.subr.mxu0 0.0
    %777 = vmatpush1.msra.mxu0 0.0
    %778 = vmatprep.subr.mxu0 0.0
    %779 = vmatpush1.msra.mxu0 0.0
    %780 = vmatprep.subr.mxu0 0.0
    %781 = vmatpush1.msra.mxu0 0.0
    %782 = vmatprep.subr.mxu0 0.0
    %783 = vmatpush1.msra.mxu0 0.0
    %784 = vmatprep.subr.mxu0 0.0
    %785 = vmatpush1.msra.mxu0 0.0
    %786 = vmatprep.subr.mxu0 0.0
    %787 = vmatpush1.msra.mxu0 0.0
    %788 = vmatprep.subr.mxu0 0.0
    %789 = vmatpush1.msra.mxu0 0.0
    %790 = vmatprep.subr.mxu0 0.0
    %791 = vmatpush1.msra.mxu0 0.0
    %792 = vmatprep.subr.mxu0 0.0
    %793 = vmatpush1.msra.mxu0 0.0
    %794 = vmatprep.subr.mxu0 0.0
    %795 = vmatpush1.msra.mxu0 0.0
    %796 = vmatprep.mubr.f32.mxu0 0.0
    %v797 = vand.u32 %v649, 4294901760
    %798 = vmatmul.mubr.f32.gmra.mrb[0].mxu0 %v797
    %v799 = vpop.f32.mrb[0].mxu0
    %v800 = vadd.f32 %v724, %v799
    %v801 = vpop.f32.mrb[0].mxu0
    %802 = vdwg.mxu0
    %803 = vmatprep.subr.mxu0 0.0
    %v804 = vand.u32 %v639, 4294901760
    %v805 = vsub.f32 %v639, %v804
    %806 = vmatpush1.msra.mxu0 %v805
    %807 = vmatprep.subr.mxu0 0.0
    %808 = vmatpush1.msra.mxu0 0.0
    %809 = vmatprep.subr.mxu0 0.0
    %810 = vmatpush1.msra.mxu0 0.0
    %811 = vmatprep.subr.mxu0 0.0
    %812 = vmatpush1.msra.mxu0 0.0
    %813 = vmatprep.subr.mxu0 0.0
    %814 = vmatpush1.msra.mxu0 0.0
    %815 = vmatprep.subr.mxu0 0.0
    %816 = vmatpush1.msra.mxu0 0.0
    %817 = vmatprep.subr.mxu0 0.0
    %818 = vmatpush1.msra.mxu0 0.0
    %819 = vmatprep.subr.mxu0 0.0
    %820 = vmatpush1.msra.mxu0 0.0
    %821 = vmatprep.subr.mxu0 0.0
    %822 = vmatpush1.msra.mxu0 0.0
    %823 = vmatprep.subr.mxu0 0.0
    %824 = vmatpush1.msra.mxu0 0.0
    %825 = vmatprep.subr.mxu0 0.0
    %826 = vmatpush1.msra.mxu0 0.0
    %827 = vmatprep.subr.mxu0 0.0
    %828 = vmatpush1.msra.mxu0 0.0
    %829 = vmatprep.subr.mxu0 0.0
    %830 = vmatpush1.msra.mxu0 0.0
    %831 = vmatprep.subr.mxu0 0.0
    %832 = vmatpush1.msra.mxu0 0.0
    %833 = vmatprep.subr.mxu0 0.0
    %834 = vmatpush1.msra.mxu0 0.0
    %835 = vmatprep.subr.mxu0 0.0
    %836 = vmatpush1.msra.mxu0 0.0
    %837 = vmatprep.subr.mxu0 0.0
    %838 = vmatpush1.msra.mxu0 0.0
    %839 = vmatprep.subr.mxu0 0.0
    %840 = vmatpush1.msra.mxu0 0.0
    %841 = vmatprep.subr.mxu0 0.0
    %842 = vmatpush1.msra.mxu0 0.0
    %843 = vmatprep.subr.mxu0 0.0
    %844 = vmatpush1.msra.mxu0 0.0
    %845 = vmatprep.subr.mxu0 0.0
    %846 = vmatpush1.msra.mxu0 0.0
    %847 = vmatprep.subr.mxu0 0.0
    %848 = vmatpush1.msra.mxu0 0.0
    %849 = vmatprep.subr.mxu0 0.0
    %850 = vmatpush1.msra.mxu0 0.0
    %851 = vmatprep.subr.mxu0 0.0
    %852 = vmatpush1.msra.mxu0 0.0
    %853 = vmatprep.subr.mxu0 0.0
    %854 = vmatpush1.msra.mxu0 0.0
    %855 = vmatprep.subr.mxu0 0.0
    %856 = vmatpush1.msra.mxu0 0.0
    %857 = vmatprep.subr.mxu0 0.0
    %858 = vmatpush1.msra.mxu0 0.0
    %859 = vmatprep.subr.mxu0 0.0
    %860 = vmatpush1.msra.mxu0 0.0
    %861 = vmatprep.subr.mxu0 0.0
    %862 = vmatpush1.msra.mxu0 0.0
    %863 = vmatprep.subr.mxu0 0.0
    %864 = vmatpush1.msra.mxu0 0.0
    %865 = vmatprep.subr.mxu0 0.0
    %866 = vmatpush1.msra.mxu0 0.0
    %867 = vmatprep.subr.mxu0 0.0
    %868 = vmatpush1.msra.mxu0 0.0
    %869 = vmatprep.mubr.f32.mxu0 0.0
    %v870 = vand.u32 %v649, 4294901760
    %v871 = vsub.f32 %v649, %v870
    %872 = vmatmul.mubr.f32.gmra.mrb[0].mxu0 %v871
    %v873 = vpop.f32.mrb[0].mxu0
    %v874 = vadd.f32 %v800, %v873
    %v875 = vpop.f32.mrb[0].mxu0
    %876 = vdwg.mxu0
    %877 = vmatprep.subr.mxu0 0.0
    %v878 = vand.u32 %v639, 4294901760
    %879 = vmatpush1.msra.mxu0 %v878
    %880 = vmatprep.subr.mxu0 0.0
    %881 = vmatpush1.msra.mxu0 0.0
    %882 = vmatprep.subr.mxu0 0.0
    %883 = vmatpush1.msra.mxu0 0.0
    %884 = vmatprep.subr.mxu0 0.0
    %885 = vmatpush1.msra.mxu0 0.0
    %886 = vmatprep.subr.mxu0 0.0
    %887 = vmatpush1.msra.mxu0 0.0
    %888 = vmatprep.subr.mxu0 0.0
    %889 = vmatpush1.msra.mxu0 0.0
    %890 = vmatprep.subr.mxu0 0.0
    %891 = vmatpush1.msra.mxu0 0.0
    %892 = vmatprep.subr.mxu0 0.0
    %893 = vmatpush1.msra.mxu0 0.0
    %894 = vmatprep.subr.mxu0 0.0
    %895 = vmatpush1.msra.mxu0 0.0
    %896 = vmatprep.subr.mxu0 0.0
    %897 = vmatpush1.msra.mxu0 0.0
    %898 = vmatprep.subr.mxu0 0.0
    %899 = vmatpush1.msra.mxu0 0.0
    %900 = vmatprep.subr.mxu0 0.0
    %901 = vmatpush1.msra.mxu0 0.0
    %902 = vmatprep.subr.mxu0 0.0
    %903 = vmatpush1.msra.mxu0 0.0
    %904 = vmatprep.subr.mxu0 0.0
    %905 = vmatpush1.msra.mxu0 0.0
    %906 = vmatprep.subr.mxu0 0.0
    %907 = vmatpush1.msra.mxu0 0.0
    %908 = vmatprep.subr.mxu0 0.0
    %909 = vmatpush1.msra.mxu0 0.0
    %910 = vmatprep.subr.mxu0 0.0
    %911 = vmatpush1.msra.mxu0 0.0
    %912 = vmatprep.subr.mxu0 0.0
    %913 = vmatpush1.msra.mxu0 0.0
    %914 = vmatprep.subr.mxu0 0.0
    %915 = vmatpush1.msra.mxu0 0.0
    %916 = vmatprep.subr.mxu0 0.0
    %917 = vmatpush1.msra.mxu0 0.0
    %918 = vmatprep.subr.mxu0 0.0
    %919 = vmatpush1.msra.mxu0 0.0
    %920 = vmatprep.subr.mxu0 0.0
    %921 = vmatpush1.msra.mxu0 0.0
    %922 = vmatprep.subr.mxu0 0.0
    %923 = vmatpush1.msra.mxu0 0.0
    %924 = vmatprep.subr.mxu0 0.0
    %925 = vmatpush1.msra.mxu0 0.0
    %926 = vmatprep.subr.mxu0 0.0
    %927 = vmatpush1.msra.mxu0 0.0
    %928 = vmatprep.subr.mxu0 0.0
    %929 = vmatpush1.msra.mxu0 0.0
    %930 = vmatprep.subr.mxu0 0.0
    %931 = vmatpush1.msra.mxu0 0.0
    %932 = vmatprep.subr.mxu0 0.0
    %933 = vmatpush1.msra.mxu0 0.0
    %934 = vmatprep.subr.mxu0 0.0
    %935 = vmatpush1.msra.mxu0 0.0
    %936 = vmatprep.subr.mxu0 0.0
    %937 = vmatpush1.msra.mxu0 0.0
    %938 = vmatprep.subr.mxu0 0.0
    %939 = vmatpush1.msra.mxu0 0.0
    %940 = vmatprep.subr.mxu0 0.0
    %941 = vmatpush1.msra.mxu0 0.0
    %942 = vmatprep.mubr.f32.mxu0 0.0
    %v943 = vand.u32 %v649, 4294901760
    %v944 = vsub.f32 %v649, %v943
    %v945 = vand.u32 %v944, 4294901760
    %946 = vmatmul.mubr.f32.gmra.mrb[0].mxu0 %v945
    %v947 = vpop.f32.mrb[0].mxu0
    %v948 = vadd.f32 %v874, %v947
    %v949 = vpop.f32.mrb[0].mxu0
    %950 = vdwg.mxu0
    %951 = vmatprep.subr.mxu0 0.0
    %v952 = vand.u32 %v639, 4294901760
    %v953 = vsub.f32 %v639, %v952
    %v954 = vand.u32 %v953, 4294901760
    %955 = vmatpush1.msra.mxu0 %v954
    %956 = vmatprep.subr.mxu0 0.0
    %957 = vmatpush1.msra.mxu0 0.0
    %958 = vmatprep.subr.mxu0 0.0
    %959 = vmatpush1.msra.mxu0 0.0
    %960 = vmatprep.subr.mxu0 0.0
    %961 = vmatpush1.msra.mxu0 0.0
    %962 = vmatprep.subr.mxu0 0.0
    %963 = vmatpush1.msra.mxu0 0.0
    %964 = vmatprep.subr.mxu0 0.0
    %965 = vmatpush1.msra.mxu0 0.0
    %966 = vmatprep.subr.mxu0 0.0
    %967 = vmatpush1.msra.mxu0 0.0
    %968 = vmatprep.subr.mxu0 0.0
    %969 = vmatpush1.msra.mxu0 0.0
    %970 = vmatprep.subr.mxu0 0.0
    %971 = vmatpush1.msra.mxu0 0.0
    %972 = vmatprep.subr.mxu0 0.0
    %973 = vmatpush1.msra.mxu0 0.0
    %974 = vmatprep.subr.mxu0 0.0
    %975 = vmatpush1.msra.mxu0 0.0
    %976 = vmatprep.subr.mxu0 0.0
    %977 = vmatpush1.msra.mxu0 0.0
    %978 = vmatprep.subr.mxu0 0.0
    %979 = vmatpush1.msra.mxu0 0.0
    %980 = vmatprep.subr.mxu0 0.0
    %981 = vmatpush1.msra.mxu0 0.0
    %982 = vmatprep.subr.mxu0 0.0
    %983 = vmatpush1.msra.mxu0 0.0
    %984 = vmatprep.subr.mxu0 0.0
    %985 = vmatpush1.msra.mxu0 0.0
    %986 = vmatprep.subr.mxu0 0.0
    %987 = vmatpush1.msra.mxu0 0.0
    %988 = vmatprep.subr.mxu0 0.0
    %989 = vmatpush1.msra.mxu0 0.0
    %990 = vmatprep.subr.mxu0 0.0
    %991 = vmatpush1.msra.mxu0 0.0
    %992 = vmatprep.subr.mxu0 0.0
    %993 = vmatpush1.msra.mxu0 0.0
    %994 = vmatprep.subr.mxu0 0.0
    %995 = vmatpush1.msra.mxu0 0.0
    %996 = vmatprep.subr.mxu0 0.0
    %997 = vmatpush1.msra.mxu0 0.0
    %998 = vmatprep.subr.mxu0 0.0
    %999 = vmatpush1.msra.mxu0 0.0
    %1000 = vmatprep.subr.mxu0 0.0
    %1001 = vmatpush1.msra.mxu0 0.0
    %1002 = vmatprep.subr.mxu0 0.0
    %1003 = vmatpush1.msra.mxu0 0.0
    %1004 = vmatprep.subr.mxu0 0.0
    %1005 = vmatpush1.msra.mxu0 0.0
    %1006 = vmatprep.subr.mxu0 0.0
    %1007 = vmatpush1.msra.mxu0 0.0
    %1008 = vmatprep.subr.mxu0 0.0
    %1009 = vmatpush1.msra.mxu0 0.0
    %1010 = vmatprep.subr.mxu0 0.0
    %1011 = vmatpush1.msra.mxu0 0.0
    %1012 = vmatprep.subr.mxu0 0.0
    %1013 = vmatpush1.msra.mxu0 0.0
    %1014 = vmatprep.subr.mxu0 0.0
    %1015 = vmatpush1.msra.mxu0 0.0
    %1016 = vmatprep.subr.mxu0 0.0
    %1017 = vmatpush1.msra.mxu0 0.0
    %1018 = vmatprep.mubr.f32.mxu0 0.0
    %v1019 = vand.u32 %v649, 4294901760
    %1020 = vmatmul.mubr.f32.gmra.mrb[0].mxu0 %v1019
    %v1021 = vpop.f32.mrb[0].mxu0
    %v1022 = vadd.f32 %v948, %v1021
    %v1023 = vpop.f32.mrb[0].mxu0
    %1024 = vdwg.mxu0
    %1025 = vmatprep.subr.mxu0 0.0
    %v1026 = vand.u32 %v639, 4294901760
    %1027 = vmatpush1.msra.mxu0 %v1026
    %1028 = vmatprep.subr.mxu0 0.0
    %1029 = vmatpush1.msra.mxu0 0.0
    %1030 = vmatprep.subr.mxu0 0.0
    %1031 = vmatpush1.msra.mxu0 0.0
    %1032 = vmatprep.subr.mxu0 0.0
    %1033 = vmatpush1.msra.mxu0 0.0
    %1034 = vmatprep.subr.mxu0 0.0
    %1035 = vmatpush1.msra.mxu0 0.0
    %1036 = vmatprep.subr.mxu0 0.0
    %1037 = vmatpush1.msra.mxu0 0.0
    %1038 = vmatprep.subr.mxu0 0.0
    %1039 = vmatpush1.msra.mxu0 0.0
    %1040 = vmatprep.subr.mxu0 0.0
    %1041 = vmatpush1.msra.mxu0 0.0
    %1042 = vmatprep.subr.mxu0 0.0
    %1043 = vmatpush1.msra.mxu0 0.0
    %1044 = vmatprep.subr.mxu0 0.0
    %1045 = vmatpush1.msra.mxu0 0.0
    %1046 = vmatprep.subr.mxu0 0.0
    %1047 = vmatpush1.msra.mxu0 0.0
    %1048 = vmatprep.subr.mxu0 0.0
    %1049 = vmatpush1.msra.mxu0 0.0
    %1050 = vmatprep.subr.mxu0 0.0
    %1051 = vmatpush1.msra.mxu0 0.0
    %1052 = vmatprep.subr.mxu0 0.0
    %1053 = vmatpush1.msra.mxu0 0.0
    %1054 = vmatprep.subr.mxu0 0.0
    %1055 = vmatpush1.msra.mxu0 0.0
    %1056 = vmatprep.subr.mxu0 0.0
    %1057 = vmatpush1.msra.mxu0 0.0
    %1058 = vmatprep.subr.mxu0 0.0
    %1059 = vmatpush1.msra.mxu0 0.0
    %1060 = vmatprep.subr.mxu0 0.0
    %1061 = vmatpush1.msra.mxu0 0.0
    %1062 = vmatprep.subr.mxu0 0.0
    %1063 = vmatpush1.msra.mxu0 0.0
    %1064 = vmatprep.subr.mxu0 0.0
    %1065 = vmatpush1.msra.mxu0 0.0
    %1066 = vmatprep.subr.mxu0 0.0
    %1067 = vmatpush1.msra.mxu0 0.0
    %1068 = vmatprep.subr.mxu0 0.0
    %1069 = vmatpush1.msra.mxu0 0.0
    %1070 = vmatprep.subr.mxu0 0.0
    %1071 = vmatpush1.msra.mxu0 0.0
    %1072 = vmatprep.subr.mxu0 0.0
    %1073 = vmatpush1.msra.mxu0 0.0
    %1074 = vmatprep.subr.mxu0 0.0
    %1075 = vmatpush1.msra.mxu0 0.0
    %1076 = vmatprep.subr.mxu0 0.0
    %1077 = vmatpush1.msra.mxu0 0.0
    %1078 = vmatprep.subr.mxu0 0.0
    %1079 = vmatpush1.msra.mxu0 0.0
    %1080 = vmatprep.subr.mxu0 0.0
    %1081 = vmatpush1.msra.mxu0 0.0
    %1082 = vmatprep.subr.mxu0 0.0
    %1083 = vmatpush1.msra.mxu0 0.0
    %1084 = vmatprep.subr.mxu0 0.0
    %1085 = vmatpush1.msra.mxu0 0.0
    %1086 = vmatprep.subr.mxu0 0.0
    %1087 = vmatpush1.msra.mxu0 0.0
    %1088 = vmatprep.subr.mxu0 0.0
    %1089 = vmatpush1.msra.mxu0 0.0
    %1090 = vmatprep.mubr.f32.mxu0 0.0
    %v1091 = vand.u32 %v649, 4294901760
    %1092 = vmatmul.mubr.f32.gmra.mrb[0].mxu0 %v1091
    %v1093 = vpop.f32.mrb[0].mxu0
    %v1094 = vadd.f32 %v1022, %v1093
    %v1095 = vpop.f32.mrb[0].mxu0
    %1096 = vdwg.mxu0
    %v1097 = vxor.u32 %v1094, 2147483648
    %v1098 = vmul.f32 %v1097, 1.442695
    %v1099 = vpow.pop %v1098
    %v1100 = vadd.f32 %v1099, 1.0
    %v1101 = vrcp.pop %v1100
    %v1102 = vmul.f32 1.0, %v1101
    %v1103 = vlaneseq
    %v1104 = vshrl.u32 %v1103, 7
    %v1105 = vsub.s32 0, %v1104
    %v1106 = vrot.slane %v1102, %v1105
    %1108 = vbcast.lane.b32.xlu0 %v1106, 256
    %v1109 = vpop.permute.xlu0 %1108
    %s1111 = sor.u32 256, 8
    %1112 = vbcast.lane.b32.xlu0 %v1106, %s1111
    %v1113 = vpop.permute.xlu0 %1112
    %s1115 = sor.u32 256, 16
    %1116 = vbcast.lane.b32.xlu0 %v1106, %s1115
    %v1117 = vpop.permute.xlu0 %1116
    %s1119 = sor.u32 256, 24
    %1120 = vbcast.lane.b32.xlu0 %v1106, %s1119
    %v1121 = vpop.permute.xlu0 %1120
    %v1122 = vlaneseq
    %v1123 = vshrl.u32 %v1122, 7
    %v1124 = vsub.s32 1, %v1123
    %v1125 = vrot.slane %v1102, %v1124
    %1127 = vbcast.lane.b32.xlu0 %v1125, 256
    %v1128 = vpop.permute.xlu0 %1127
    %s1130 = sor.u32 256, 8
    %1131 = vbcast.lane.b32.xlu0 %v1125, %s1130
    %v1132 = vpop.permute.xlu0 %1131
    %s1134 = sor.u32 256, 16
    %1135 = vbcast.lane.b32.xlu0 %v1125, %s1134
    %v1136 = vpop.permute.xlu0 %1135
    %s1138 = sor.u32 256, 24
    %1139 = vbcast.lane.b32.xlu0 %v1125, %s1138
    %v1140 = vpop.permute.xlu0 %1139
    %v1141 = vmul.f32 %v35, %v1109
    %v1142 = vmul.f32 %v36, %v1109
    %v1143 = vmul.f32 %v37, %v1113
    %v1144 = vmul.f32 %v38, %v1113
    %v1145 = vmul.f32 %v39, %v1117
    %v1146 = vmul.f32 %v40, %v1117
    %v1147 = vmul.f32 %v41, %v1121
    %v1148 = vmul.f32 %v42, %v1121
    %v1149 = vmul.f32 %v43, %v1128
    %v1150 = vmul.f32 %v44, %v1128
    %v1151 = vmul.f32 %v45, %v1132
    %v1152 = vmul.f32 %v46, %v1132
    %v1153 = vmul.f32 %v47, %v1136
    %v1154 = vmul.f32 %v48, %v1136
    %v1155 = vmul.f32 %v49, %v1140
    %v1156 = vmul.f32 %v50, %v1140
    %1157 = vst [vmem:[#allocation5] sm:$0xff] %v1141
    %1158 = vst [vmem:[#allocation5 + $0x8] sm:$0xff] %v1142
    %1159 = vst [vmem:[#allocation5 + $0x10] sm:$0xff] %v1143
    %1160 = vst [vmem:[#allocation5 + $0x18] sm:$0xff] %v1144
    %1161 = vst [vmem:[#allocation5 + $0x20] sm:$0xff] %v1145
    %1162 = vst [vmem:[#allocation5 + $0x28] sm:$0xff] %v1146
    %1163 = vst [vmem:[#allocation5 + $0x30] sm:$0xff] %v1147
    %1164 = vst [vmem:[#allocation5 + $0x38] sm:$0xff] %v1148
    %1165 = vst [vmem:[#allocation5 + $0x40] sm:$0xff] %v1149
    %1166 = vst [vmem:[#allocation5 + $0x48] sm:$0xff] %v1150
    %1167 = vst [vmem:[#allocation5 + $0x50] sm:$0xff] %v1151
    %1168 = vst [vmem:[#allocation5 + $0x58] sm:$0xff] %v1152
    %1169 = vst [vmem:[#allocation5 + $0x60] sm:$0xff] %v1153
    %1170 = vst [vmem:[#allocation5 + $0x68] sm:$0xff] %v1154
    %1171 = vst [vmem:[#allocation5 + $0x70] sm:$0xff] %v1155
    %1172 = vst [vmem:[#allocation5 + $0x78] sm:$0xff] %v1156
    // Predicated region
    $region26: #{tpu_custom_call.1} parent=1 // pred_check
      _
    $region27: #{tpu_custom_call.1} parent=1 // pred_check_branch
      %1174 = sbr.rel (0) target = $region29
    $region28: #{tpu_custom_call.1} parent=1 // pred_region
      %s1176 = ssub.s32 2048, 2048
      %1177 = vsyncadd [#allocation4], %s1176
      %s1178 = sshll.u32 [#allocation5], 4
      %s1179 = int_to_ptr.vmem [resolvable:$true] %s1178
      %1184 = dma.vmem_to_hbm [thread:$0]  %s1179, 2048, %s5, [#allocation4], 256, 256, 16
    $region29: #{tpu_custom_call.1} parent=1 // pred_fallthru
      _
    // Predicated region
    $region30: #{tpu_custom_call.1} parent=1 // pred_check
      _
    $region31: #{tpu_custom_call.1} parent=1 // pred_check_branch
      %1186 = sbr.rel (0) target = $region33
    $region32: #{tpu_custom_call.1} parent=1 // pred_region
      %1187 = dma.done [#allocation4], 2048
    $region33: #{tpu_custom_call.1} parent=1 // pred_fallthru
      _
    %1188 = vsyncpa [#allocation3], 1
    %1189 = vsyncpa [#allocation4], 1

</llo_original>
